<compile_context>
chip_gen: v6e
topology: v6e:2x2x1
jax: 0.10.0
libtpu: 0.0.40
codegen_flags: <defaults>
</compile_context>

<pallas_src>
import jax
import jax.numpy as jnp
from jax.experimental import pallas as pl
from jax.experimental.pallas import tpu as pltpu

NUM_CLASSES = 256


def _one_hot_kernel(tok_ref, out_ref):
    """One grid step == one (TM, 256) output tile.

    tok_ref : VMEM (TM, 1)   int32 -- pre-shifted token ids (column layout)
    out_ref : VMEM (TM, 256) f32   -- one-hot expansion, single unmasked store
    """
    cls = jax.lax.broadcasted_iota(jnp.int32, out_ref.shape, 1)   # (TM, 256)
    out_ref[...] = (tok_ref[...] == cls).astype(jnp.float32)


def _round_up(x, m):
    return -(-x // m) * m


def _pick_tiles(n, tm):
    """Choose (TM, N_pad): TM divides N_pad, N_pad >= n, minimizing padding/slice.

    Returns exact (no-padding) tilings whenever possible so the trailing
    out[:N] slice (an extra full read+write of the output) is avoided.
    """
    tm = max(8, tm - (tm % 8))

    # Small problems: one exact full-array block. A block dim equal to the full
    # array dim is exempt from the 8-sublane rule, so no padding and no slice.
    if n <= 4096:
        return n, n

    n8 = _round_up(n, 8)
    # Cap the row tile so large problems get >= 4 grid steps (2 per TC on v7x),
    # with a 1024-row floor so tiles stay big enough to amortize step overhead.
    cap = min(tm, max(1024, _round_up(-(-n8 // 4), 8)))
    cap -= cap % 8

    # Largest multiple of 8 <= cap that divides n8 (8 always divides n8).
    t = cap
    while n8 % t:
        t -= 8

    if n8 == n and (t == cap or t >= 256):
        # Exact output shape, decent tile -> no post-kernel slice copy.
        return t, n8

    # Awkward N: pad rows up to a multiple of cap; costs one output slice copy.
    return cap, _round_up(n, cap)


def model_mock_forward(inputs, next_tokens, *, tm=4096):
    """Functional equivalent of ModelMock(next_tokens).forward(inputs).

    inputs      : (B, ...) integer token ids, each in [0, 256)
    next_tokens : (>= B,) integer token ids; row i consumes next_tokens[i]
                  (the stateful `self.next_tokens = self.next_tokens[1:]`
                  list-popping is expressed functionally as an array argument).
    returns     : (B, L, 256) float32, L = prod(inputs.shape[1:])
    """
    B = inputs.shape[0]
    tokens = inputs.reshape(B, -1).astype(jnp.int32)          # .view(numel()) per row
    L = tokens.shape[1]

    nxt = jnp.asarray(next_tokens, jnp.int32)
    assert nxt.shape[0] >= B, "need at least one next_token per batch row"
    nxt = nxt[:B]

    # Wrapper-side shift: drop first token of each row, append this row's next
    # token.  Cheap XLA concat on a (B, L) int32 array.
    shifted = jnp.concatenate([tokens[:, 1:], nxt[:, None]], axis=1)   # (B, L)

    N = B * L
    TM, N_pad = _pick_tiles(N, tm)

    col = shifted.reshape(N, 1)                                # sublane-major column
    if N_pad != N:
        # pad with token 0 (valid class id); padded rows are sliced off below.
        col = jnp.pad(col, ((0, N_pad - N), (0, 0)))

    # Explicit scoped-VMEM budget: (TM,1) int32 blocks pad to 128 lanes
    # (TM*512 B each); both input and output are double-buffered by default.
    in_buf = TM * 128 * 4
    out_buf = TM * NUM_CLASSES * 4
    vmem_limit = int(min(48 << 20, max(16 << 20, 4 * (in_buf + out_buf))))

    out = pl.pallas_call(
        _one_hot_kernel,
        out_shape=jax.ShapeDtypeStruct((N_pad, NUM_CLASSES), jnp.float32),
        grid_spec=pltpu.PrefetchScalarGridSpec(
            num_scalar_prefetch=0,
            grid=(N_pad // TM,),
            in_specs=[pl.BlockSpec((TM, 1), lambda i: (i, 0))],
            out_specs=pl.BlockSpec((TM, NUM_CLASSES), lambda i: (i, 0)),
        ),
        compiler_params=pltpu.CompilerParams(
            dimension_semantics=("parallel",),
            vmem_limit_bytes=vmem_limit,
        ),
        cost_estimate=pl.CostEstimate(
            flops=N_pad * NUM_CLASSES,          # one compare per output element
            transcendentals=0,
            bytes_accessed=N_pad * NUM_CLASSES * 4 + N_pad * 4,
        ),
    )(col)

    if N_pad != N:
        out = out[:N]          # only for genuinely awkward N
    return out.reshape(B, L, NUM_CLASSES)      # free view when N_pad == N


if __name__ == "__main__":
    def _check(B, L, key):
        k_in, k_nt = jax.random.split(key)
        inputs = jax.random.randint(k_in, (B, L), 0, NUM_CLASSES, dtype=jnp.int32)
        next_tokens = jax.random.randint(k_nt, (B,), 0, NUM_CLASSES, dtype=jnp.int32)

        out = jax.block_until_ready(model_mock_forward(inputs, next_tokens))

        # reference (plain JAX) check of the exact PyTorch semantics
        shifted = jnp.concatenate([inputs[:, 1:], next_tokens[:, None]], axis=1)
        expected = jax.nn.one_hot(shifted, NUM_CLASSES, dtype=jnp.float32)
        assert out.shape == (B, L, NUM_CLASSES)
        assert out.dtype == jnp.float32
        assert bool(jnp.array_equal(out, expected))

    # primary small case (matches the module's typical usage)
    _check(2, 16, jax.random.PRNGKey(0))
    # awkward N (not a multiple of 8) -> exact single full-array block path
    _check(3, 7, jax.random.PRNGKey(1))
    # larger N -> multi-step divisor-tile path (>= 4 grid steps for v7x megacore)
    _check(4, 2048, jax.random.PRNGKey(2))

    print("KERNEL_OK")
</pallas_src>

<mosaic_0001>
module attributes {stable_mosaic.version = 11 : i64} {
  func.func @_one_hot_kernel(%arg0: i32, %arg1: memref<32x1xi32, #tpu.memory_space<vmem>>, %arg2: memref<32x256xf32, #tpu.memory_space<vmem>>) attributes {dimension_semantics = [#tpu.dimension_semantics<parallel>], iteration_bounds = array<i64: 1>, scalar_prefetch = 0 : i64, scratch_operands = 0 : i64, tpu.core_type = #tpu.core_type<tc>, window_params = [{transform_indices = @transform_0, window_bounds = array<i64: 32, 1>}, {transform_indices = @transform_1, window_bounds = array<i64: 32, 256>}]} {
    %0 = tpu.iota {dimensions = array<i32: 1>} : vector<32x256xi32>
    %c0 = arith.constant 0 : index
    %c0_0 = arith.constant 0 : index
    %1 = vector.load %arg1[%c0, %c0_0] : memref<32x1xi32, #tpu.memory_space<vmem>>, vector<32x1xi32>
    %2 = vector.broadcast %1 : vector<32x1xi32> to vector<32x256xi32>
    %3 = arith.cmpi eq, %2, %0 : vector<32x256xi32>
    %4 = arith.extui %3 : vector<32x256xi1> to vector<32x256xi32>
    %5 = arith.sitofp %4 : vector<32x256xi32> to vector<32x256xf32>
    %c0_1 = arith.constant 0 : index
    %c0_2 = arith.constant 0 : index
    %6 = vector.load %arg2[%c0_1, %c0_2] : memref<32x256xf32, #tpu.memory_space<vmem>>, vector<32x256xf32>
    tpu.vector_store %arg2[%c0_1, %c0_2], %5 {strides = array<i32>} : memref<32x256xf32, #tpu.memory_space<vmem>>, vector<32x256xf32>,
    return
  }
  func.func @transform_0(%arg0: i32) -> (i32, i32) {
    %c0_i32 = arith.constant 0 : i32
    %c0_i32_0 = arith.constant 0 : i32
    return %arg0, %c0_i32 : i32, i32
  }
  func.func @transform_1(%arg0: i32) -> (i32, i32) {
    %c0_i32 = arith.constant 0 : i32
    %c0_i32_0 = arith.constant 0 : i32
    return %arg0, %c0_i32 : i32, i32
  }
}

</mosaic_0001>

<llo_original>
// kernel: tpu_custom_call.1
$region0: #{tpu_custom_call.1}
  #allocation0 [shape = 'u32[]', space=smem, size = 0x4, offset = 0x4, fixed_abs, tag = 'smem constant byte address 0x4 - core index']
  #allocation1 [shape = 'u32[144,128]{1,0:T(1,128)}', space=vmem, size = 0x12000, scoped, tag = 'internal scratch']
  %s0 = inlined_call_operand.vmem [shape: s32[32,1], index: 0, kind: input, shape index: {}]
  %s1 = inlined_call_operand.hbm [shape: f32[32,256], index: 1, kind: output, shape index: {}]
  %s2 = sld [smem:[#allocation0]]
  $region14: #{tpu_custom_call.1} parent=0
    _
  %s4 = ssub.s32 1, %s2
  %s5 = scalar_select 0, %s4, %s2
  $region1: #{tpu_custom_call.1} parent=0
    #allocation2 [shape = 'u8[32768]{0}', space=vmem, size = 0x8000, scoped, tag = 'output window, operand 0, single buffered']
    #allocation3 [shape = 's32[1]{0}', space=sflag, size = 0x4, scoped, tag = 'scoped memory for tpu_custom_call.1']
    %6 = vsyncpa [#allocation3], 0
    // Predicated region
    $region2: #{tpu_custom_call.1} parent=1 // pred_check
      _
    $region3: #{tpu_custom_call.1} parent=1 // pred_check_branch
      %8 = sbr.rel (0) target = $region5
    $region4: #{tpu_custom_call.1} parent=1 // pred_region
      _
    $region5: #{tpu_custom_call.1} parent=1 // pred_fallthru
      _
    %v9 = vlaneseq
    %v10 = vand.u32 %v9, 127
    %v11 = vadd.s32 %v10, 128
    %v12 = vld [vmem:[%s0] sm:$0xff]
    %v13 = vld [vmem:[%s0 + $0x8] sm:$0xff]
    %v14 = vld [vmem:[%s0 + $0x10] sm:$0xff]
    %v15 = vld [vmem:[%s0 + $0x18] sm:$0xff]
    %16 = vset.pattern.permute.xlu0 0
    %17 = vperm.xlu0 %16, %v12
    %v18 = vpop.permute.xlu0 %17
    %19 = vset.pattern.permute.xlu0 0
    %20 = vperm.xlu0 %19, %v13
    %v21 = vpop.permute.xlu0 %20
    %22 = vset.pattern.permute.xlu0 0
    %23 = vperm.xlu0 %22, %v14
    %v24 = vpop.permute.xlu0 %23
    %25 = vset.pattern.permute.xlu0 0
    %26 = vperm.xlu0 %25, %v15
    %v27 = vpop.permute.xlu0 %26
    %vm28 = vcmp.eq.s32.totalorder %v18, %v10
    %vm29 = vcmp.eq.s32.totalorder %v18, %v11
    %vm30 = vcmp.eq.s32.totalorder %v21, %v10
    %vm31 = vcmp.eq.s32.totalorder %v21, %v11
    %vm32 = vcmp.eq.s32.totalorder %v24, %v10
    %vm33 = vcmp.eq.s32.totalorder %v24, %v11
    %vm34 = vcmp.eq.s32.totalorder %v27, %v10
    %vm35 = vcmp.eq.s32.totalorder %v27, %v11
    %v36 = vsel %vm28, 1, 0
    %v37 = vsel %vm29, 1, 0
    %v38 = vsel %vm30, 1, 0
    %v39 = vsel %vm31, 1, 0
    %v40 = vsel %vm32, 1, 0
    %v41 = vsel %vm33, 1, 0
    %v42 = vsel %vm34, 1, 0
    %v43 = vsel %vm35, 1, 0
    %v44 = vcvt.s32.f32 %v36
    %v45 = vcvt.s32.f32 %v37
    %v46 = vcvt.s32.f32 %v38
    %v47 = vcvt.s32.f32 %v39
    %v48 = vcvt.s32.f32 %v40
    %v49 = vcvt.s32.f32 %v41
    %v50 = vcvt.s32.f32 %v42
    %v51 = vcvt.s32.f32 %v43
    %52 = vst [vmem:[#allocation2] sm:$0xff] %v44
    %53 = vst [vmem:[#allocation2 + $0x8] sm:$0xff] %v45
    %54 = vst [vmem:[#allocation2 + $0x10] sm:$0xff] %v46
    %55 = vst [vmem:[#allocation2 + $0x18] sm:$0xff] %v47
    %56 = vst [vmem:[#allocation2 + $0x20] sm:$0xff] %v48
    %57 = vst [vmem:[#allocation2 + $0x28] sm:$0xff] %v49
    %58 = vst [vmem:[#allocation2 + $0x30] sm:$0xff] %v50
    %59 = vst [vmem:[#allocation2 + $0x38] sm:$0xff] %v51
    // Predicated region
    $region6: #{tpu_custom_call.1} parent=1 // pred_check
      _
    $region7: #{tpu_custom_call.1} parent=1 // pred_check_branch
      %61 = sbr.rel (0) target = $region9
    $region8: #{tpu_custom_call.1} parent=1 // pred_region
      %s63 = ssub.s32 1024, 1024
      %64 = vsyncadd [#allocation3], %s63
      %s65 = sshll.u32 [#allocation2], 4
      %s66 = int_to_ptr.vmem [resolvable:$true] %s65
      %71 = dma.vmem_to_hbm [thread:$0]  %s66, 1024, %s1, [#allocation3], 256, 256, 16
    $region9: #{tpu_custom_call.1} parent=1 // pred_fallthru
      _
    // Predicated region
    $region10: #{tpu_custom_call.1} parent=1 // pred_check
      _
    $region11: #{tpu_custom_call.1} parent=1 // pred_check_branch
      %73 = sbr.rel (0) target = $region13
    $region12: #{tpu_custom_call.1} parent=1 // pred_region
      %74 = dma.done [#allocation3], 1024
    $region13: #{tpu_custom_call.1} parent=1 // pred_fallthru
      _
    %75 = vsyncpa [#allocation3], 1

</llo_original>
